<compile_context>
chip_gen: v7x
topology: tpu7x:2x2x1
jax: 0.10.0
libtpu: 0.0.40
codegen_flags: <defaults>
</compile_context>

<pallas_src>
import math

import jax
import jax.numpy as jnp
from jax.experimental import pallas as pl
from jax.experimental.pallas import tpu as pltpu


# ---------------------------------------------------------------------------
# Exact PyTorch bicubic (a = -0.75, align_corners=False, antialias=False) matrix.
# ---------------------------------------------------------------------------
def _bicubic_matrix(in_size: int, out_size: int, coord_scale: float) -> jnp.ndarray:
    """Rows = output pixels, cols = input pixels. Matches upsample_bicubic2d (no AA)."""
    A = -0.75

    def cub1(x):  # |x| <= 1
        return ((A + 2.0) * x - (A + 3.0)) * x * x + 1.0

    def cub2(x):  # 1 < |x| < 2
        return ((A * x - 5.0 * A) * x + 8.0 * A) * x - 4.0 * A

    d = jnp.arange(out_size, dtype=jnp.float32)
    src = coord_scale * (d + 0.5) - 0.5                  # half-pixel mapping
    i0 = jnp.floor(src)
    t = src - i0

    w = jnp.stack([cub2(t + 1.0), cub1(t), cub1(1.0 - t), cub2(2.0 - t)], axis=1)  # (out, 4)
    idx = i0[:, None].astype(jnp.int32) + jnp.arange(-1, 3, dtype=jnp.int32)[None, :]
    idx = jnp.clip(idx, 0, in_size - 1)                  # border clamp (replicate)

    M = jnp.zeros((out_size, in_size), jnp.float32)
    rows = jnp.broadcast_to(jnp.arange(out_size, dtype=jnp.int32)[:, None], idx.shape)
    M = M.at[rows, idx].add(w)                           # clamped taps accumulate
    return M


def _round_up(n: int, m: int) -> int:
    return ((n + m - 1) // m) * m


# ---------------------------------------------------------------------------
# Pallas kernel: per grid step handles tb (batch*channel) slices.
#   x_ref   : (tb*Hp, W)      float32 (original input, cast to bf16 in-kernel)
#   wwt_ref : (W, OWc)        bf16, W_w^T zero-padded to OWc (mult of 8)
#   wht_ref : (Hp, OHc)       f32,  W_h^T zero-padded to (Hp, OHc)
#   o_ref   : (tb*OHc, OWc)   float32, output already in (OH, OW) orientation
# ---------------------------------------------------------------------------
def _make_resize_kernel(tb: int, hp: int, owc: int, ohc: int):
    def kernel(x_ref, wwt_ref, wht_ref, o_ref):
        # W-contraction as one big MXU matmul (M = tb*hp); bf16 cast on the VPU so the
        # wrapper never writes a padded/cast copy of the input to HBM.
        xb = x_ref[...].astype(jnp.bfloat16)
        t1 = jnp.dot(xb, wwt_ref[...],
                     preferred_element_type=jnp.float32)           # (tb*hp, owc) f32
        # Transpose only the scale-x-smaller intermediate (free reshapes: hp%8==0, owc%8==0)
        # and keep it in f32 so the (cheap) second matmul adds no extra rounding.
        t1 = t1.reshape(tb, hp, owc)
        t1t = jnp.transpose(t1, (0, 2, 1)).reshape(tb * owc, hp)   # (tb*owc, hp)
        t2 = jnp.dot(t1t, wht_ref[...],
                     preferred_element_type=jnp.float32)           # (tb*owc, ohc) f32
        # Transpose the scale^2-smaller result tile so the output leaves the kernel in its
        # final (OH, OW) orientation -> no wrapper-side transpose pass over HBM.
        out = jnp.transpose(t2.reshape(tb, owc, ohc), (0, 2, 1))   # (tb, ohc, owc)
        o_ref[...] = out.reshape(tb * ohc, owc).astype(o_ref.dtype)
    return kernel


def super_resolution_forward(x: jnp.ndarray, scale_factor: float = 4.0) -> jnp.ndarray:
    """Equivalent of SuperResolutionOperator(scale_factor).forward(x) for NCHW x."""
    B, C, H, W = x.shape
    # PyTorch: output_size = floor(input_size * (1/scale_factor)); backend coordinate
    # scale in the scale_factor-provided path is scale_factor itself.
    OH = int(math.floor(H * (1.0 / float(scale_factor))))
    OW = int(math.floor(W * (1.0 / float(scale_factor))))
    wh = _bicubic_matrix(H, OH, float(scale_factor))   # (OH, H)
    ww = _bicubic_matrix(W, OW, float(scale_factor))   # (OW, W)

    BC = B * C
    Hp = _round_up(H, 8)      # sublane alignment for free in-kernel reshapes
    OWc = _round_up(OW, 8)    # lane dim of the stored output (full-dim block -> legal)
    OHc = _round_up(OH, 8)    # sublane dim of the stored output

    # Pre-transposed, zero-padded weights (built once; no in-kernel weight transposes).
    wwt = jnp.zeros((W, OWc), jnp.float32).at[:, :OW].set(ww.T).astype(jnp.bfloat16)
    wht = jnp.zeros((Hp, OHc), jnp.float32).at[:H, :OH].set(wh.T)   # keep f32

    # --- per-generation VMEM sizing -----------------------------------------------------
    try:
        vmem_cap = int(pltpu.get_tpu_info().vmem_capacity_bytes)
    except Exception:
        vmem_cap = 64 * 1024 * 1024                     # conservative (v7x per-TC)
    vmem_limit = min(3 * vmem_cap // 4, 100 * 1024 * 1024)  # ~96MiB v5e/v6e, ~48MiB v7x
    budget = int(vmem_limit * 0.85)                      # headroom under the limit

    lane = 128
    W_l, Hp_l = _round_up(W, lane), _round_up(Hp, lane)
    OWc_l, OHc_l = _round_up(OWc, lane), _round_up(OHc, lane)
    # (8,128)-tile-aware accounting: every f32 value occupies lane-dims rounded to 128.
    per_slice = (2 * Hp * W_l * 4          # double-buffered f32 input block
                 + Hp * W_l * 2            # in-kernel bf16 copy of the input block
                 + Hp * OWc_l * 4          # t1 (f32)
                 + OWc * Hp_l * 4          # t1 transposed (f32)
                 + OWc * OHc_l * 4         # t2 (f32)
                 + OHc * OWc_l * 4         # t2 transposed (f32)
                 + 2 * OHc * OWc_l * 4)    # double-buffered f32 output block
    fixed = 2 * (_round_up(W, 8) * OWc_l * 2 + Hp * OHc_l * 4)   # double-buffered weights
    tb_max = max(1, (budget - fixed) // per_slice)
    tb_max = int(min(tb_max, BC, 512))

    # Largest tb that divides BC (no batch padding, no masked tail block) while keeping
    # >= 8 grid steps when BC allows (DMA/compute overlap + both v7x TensorCores busy).
    min_steps = min(8, BC)
    tb = 1
    for d in range(1, tb_max + 1):
        if BC % d == 0 and BC // d >= min_steps:
            tb = d
    n_blk = BC // tb

    # --- input: metadata-only reshape (no pad/cast pre-pass over HBM) -------------------
    if Hp == H:
        x2d = x.reshape(BC * H, W).astype(jnp.float32)
    else:
        # Rare path (H % 8 != 0): zero-pad H so in-kernel reshapes stay sublane-aligned.
        x2d = jnp.pad(x.reshape(BC, H, W).astype(jnp.float32),
                      ((0, 0), (0, Hp - H), (0, 0))).reshape(BC * Hp, W)

    flops = 2 * BC * (Hp * W * OWc + OWc * Hp * OHc)
    bytes_accessed = (BC * Hp * W * 4 + wwt.size * 2 + wht.size * 4 + BC * OHc * OWc * 4)

    out2d = pl.pallas_call(
        _make_resize_kernel(tb, Hp, OWc, OHc),
        out_shape=jax.ShapeDtypeStruct((BC * OHc, OWc), jnp.float32),
        grid_spec=pltpu.PrefetchScalarGridSpec(
            num_scalar_prefetch=0,
            grid=(n_blk,),
            in_specs=[
                pl.BlockSpec((tb * Hp, W), lambda i: (i, 0)),
                pl.BlockSpec((W, OWc), lambda i: (0, 0)),
                pl.BlockSpec((Hp, OHc), lambda i: (0, 0)),
            ],
            out_specs=pl.BlockSpec((tb * OHc, OWc), lambda i: (i, 0)),
        ),
        compiler_params=pltpu.CompilerParams(
            dimension_semantics=("parallel",),
            vmem_limit_bytes=int(vmem_limit),
        ),
        cost_estimate=pl.CostEstimate(flops=int(flops), transcendentals=0,
                                      bytes_accessed=int(bytes_accessed)),
    )(x2d, wwt, wht)

    # Only the tiny 8-alignment padding is sliced off; no output transpose in HBM.
    out = out2d.reshape(B, C, OHc, OWc)
    if OHc != OH or OWc != OW:
        out = out[:, :, :OH, :OW]
    return out


if __name__ == "__main__":
    key = jax.random.PRNGKey(0)
    x = jax.random.normal(key, (2, 4, 16, 16), dtype=jnp.float32)  # NCHW

    y = super_resolution_forward(x, scale_factor=4.0)
    jax.block_until_ready(y)

    assert y.shape == (2, 4, 4, 4), y.shape
    assert bool(jnp.all(jnp.isfinite(y)))

    # Pure-JAX f32 reference of the same linear operator (bicubic downsample matrices).
    wh = _bicubic_matrix(16, 4, 4.0)
    ww = _bicubic_matrix(16, 4, 4.0)
    ref = jnp.einsum('oh,bchw,pw->bcop', wh, x, ww,
                     precision=jax.lax.Precision.HIGHEST)
    err = float(jnp.max(jnp.abs(y - ref)))
    # bf16 input/W_w cast with f32 accumulation and an f32 second matmul.
    assert err < 0.1, f"max abs error {err}"

    print("KERNEL_OK")
</pallas_src>

<mosaic_0001>
module attributes {stable_mosaic.version = 11 : i64} {
  func.func @kernel(%arg0: i32, %arg1: memref<16x16xf32, #tpu.memory_space<vmem>>, %arg2: memref<16x8xbf16, #tpu.memory_space<vmem>>, %arg3: memref<16x8xf32, #tpu.memory_space<vmem>>, %arg4: memref<8x8xf32, #tpu.memory_space<vmem>>) attributes {dimension_semantics = [#tpu.dimension_semantics<parallel>], iteration_bounds = array<i64: 8>, scalar_prefetch = 0 : i64, scratch_operands = 0 : i64, tpu.core_type = #tpu.core_type<tc>, window_params = [{transform_indices = @transform_0, window_bounds = array<i64: 16, 16>}, {pipeline_mode = #tpu.pipeline_mode<synchronous>, transform_indices = @transform_1, window_bounds = array<i64: 16, 8>}, {pipeline_mode = #tpu.pipeline_mode<synchronous>, transform_indices = @transform_2, window_bounds = array<i64: 16, 8>}, {transform_indices = @transform_3, window_bounds = array<i64: 8, 8>}]} {
    %c0 = arith.constant 0 : index
    %c0_0 = arith.constant 0 : index
    %0 = vector.load %arg1[%c0, %c0_0] : memref<16x16xf32, #tpu.memory_space<vmem>>, vector<16x16xf32>
    %1 = arith.truncf %0 : vector<16x16xf32> to vector<16x16xbf16>
    %c0_1 = arith.constant 0 : index
    %c0_2 = arith.constant 0 : index
    %2 = vector.load %arg2[%c0_1, %c0_2] : memref<16x8xbf16, #tpu.memory_space<vmem>>, vector<16x8xbf16>
    %cst = arith.constant dense<0.000000e+00> : vector<16x8xf32>
    %3 = tpu.matmul %1, %2, %cst {dimension_numbers = #tpu.dot_dimension_numbers<[1], [0], [0], [1], [0, 0, 1, 1], [], []>} : vector<16x16xbf16>, vector<16x8xbf16>, vector<16x8xf32> -> vector<16x8xf32>
    %4 = vector.shape_cast %3 : vector<16x8xf32> to vector<1x16x8xf32>
    %5 = tpu.transpose %4, [0, 2, 1] : vector<1x16x8xf32> -> vector<1x8x16xf32>
    %6 = vector.shape_cast %5 : vector<1x8x16xf32> to vector<8x16xf32>
    %c0_3 = arith.constant 0 : index
    %c0_4 = arith.constant 0 : index
    %7 = vector.load %arg3[%c0_3, %c0_4] : memref<16x8xf32, #tpu.memory_space<vmem>>, vector<16x8xf32>
    %cst_5 = arith.constant dense<0.000000e+00> : vector<8x8xf32>
    %8 = tpu.matmul %6, %7, %cst_5 {dimension_numbers = #tpu.dot_dimension_numbers<[1], [0], [0], [1], [0, 0, 1, 1], [], []>} : vector<8x16xf32>, vector<16x8xf32>, vector<8x8xf32> -> vector<8x8xf32>
    %9 = vector.shape_cast %8 : vector<8x8xf32> to vector<1x8x8xf32>
    %10 = tpu.transpose %9, [0, 2, 1] : vector<1x8x8xf32> -> vector<1x8x8xf32>
    %11 = vector.shape_cast %10 : vector<1x8x8xf32> to vector<8x8xf32>
    %c0_6 = arith.constant 0 : index
    %c0_7 = arith.constant 0 : index
    %12 = vector.load %arg4[%c0_6, %c0_7] : memref<8x8xf32, #tpu.memory_space<vmem>>, vector<8x8xf32>
    tpu.vector_store %arg4[%c0_6, %c0_7], %11 {strides = array<i32>} : memref<8x8xf32, #tpu.memory_space<vmem>>, vector<8x8xf32>,
    return
  }
  func.func @transform_0(%arg0: i32) -> (i32, i32) {
    %c0_i32 = arith.constant 0 : i32
    %c0_i32_0 = arith.constant 0 : i32
    return %arg0, %c0_i32 : i32, i32
  }
  func.func @transform_1(%arg0: i32) -> (i32, i32) {
    %c0_i32 = arith.constant 0 : i32
    %c0_i32_0 = arith.constant 0 : i32
    %c0_i32_1 = arith.constant 0 : i32
    return %c0_i32, %c0_i32_0 : i32, i32
  }
  func.func @transform_2(%arg0: i32) -> (i32, i32) {
    %c0_i32 = arith.constant 0 : i32
    %c0_i32_0 = arith.constant 0 : i32
    %c0_i32_1 = arith.constant 0 : i32
    return %c0_i32, %c0_i32_0 : i32, i32
  }
  func.func @transform_3(%arg0: i32) -> (i32, i32) {
    %c0_i32 = arith.constant 0 : i32
    %c0_i32_0 = arith.constant 0 : i32
    return %arg0, %c0_i32 : i32, i32
  }
}

</mosaic_0001>

<llo_original>
// kernel: tpu_custom_call.1
$region0: #{tpu_custom_call.1}
  #allocation0 [shape = 'u32[]', space=smem, size = 0x4, offset = 0x4, fixed_abs, tag = 'smem constant byte address 0x4 - core index']
  #allocation1 [shape = 'u32[144,128]{1,0:T(1,128)}', space=vmem, size = 0x12000, scoped, tag = 'internal scratch']
  %s0 = inlined_call_operand.vmem [shape: f32[128,16], index: 0, kind: input, shape index: {}]
  %s1 = inlined_call_operand.vmem [shape: bf16[16,8], index: 1, kind: input, shape index: {}]
  %s2 = inlined_call_operand.vmem [shape: f32[16,8], index: 2, kind: input, shape index: {}]
  %s3 = inlined_call_operand.vmem [shape: f32[64,8], index: 3, kind: output, shape index: {}]
  %s4 = sld [smem:[#allocation0]]
  $region45: #{tpu_custom_call.1} parent=0
    _
  %s6 = ssub.s32 1, %s4
  %s7 = scalar_select 0, %s6, %s4
  loop: start=0, step=1, limit=10
  $region2: #{tpu_custom_call.1} parent=0 // loop_pre_header
    _
  $region3: #{tpu_custom_call.1} parent=0 // loop_header
    %s9 = sphi 0, %s13
    %p10 = scmp.ge.s32.totalorder %s9, 10
    %s19 = sphi 0, %s21
    %s22 = sphi 0, %s19
    %s23 = sphi 0, %s22
    %s39 = sphi 0, %s23
    %s43 = sphi 0, %s43
    %s45 = sphi 0, %s43
    %s46 = sphi 0, %s45
    %s60 = sphi 0, %s46
    %s64 = sphi 0, %s64
    %s66 = sphi 0, %s64
    %s67 = sphi 0, %s66
    %s81 = sphi 0, %s67
    %s87 = sphi 0, %s89
    %s90 = sphi 0, %s87
    %s91 = sphi 0, %s90
    %s107 = sphi 0, %s91
  $region4: #{tpu_custom_call.1} parent=0 // loop_header_branch
    %12 = sbr.rel (%p10) target = $region8
  $region5: #{tpu_custom_call.1} parent=0 // loop_body
    %s14 = ssub.s32 %s9, 1
    %s15 = ssub.s32 %s9, 2
    %s16 = sadd.s32 %s9, 1
    %s17 = ssub.s32 %s9, %s16
    %p18 = scmp.eq.s32.totalorder %s17, 0
    %s20 = sadd.s32 %s19, 1
    %s21 = scalar_select %p18, %s19, %s20
    %p24 = pneg %p18
    %p25 = scmp.eq.s32.totalorder %s9, 7
    %p26 = por %p24, %p25
    %p27 = scmp.ne.s32.totalorder %s19, %s22
    %p28 = scmp.eq.s32.totalorder %s9, 0
    %p29 = por %p27, %p28
    %p30 = scmp.ne.s32.totalorder %s19, %s22
    %p31 = scmp.eq.s32.totalorder %s14, 7
    %p32 = por %p30, %p31
    %p33 = scmp.ne.s32.totalorder %s22, %s23
    %p34 = scmp.eq.s32.totalorder %s14, 0
    %p35 = por %p33, %p34
    %p36 = scmp.ne.s32.totalorder %s22, %s23
    %p37 = scmp.eq.s32.totalorder %s15, 7
    %p38 = por %p36, %p37
    %p40 = scmp.ne.s32.totalorder %s23, %s39
    %p41 = scmp.eq.s32.totalorder %s15, 0
    %p42 = por %p40, %p41
    %s44 = sadd.s32 %s43, 1
    %p47 = scmp.eq.s32.totalorder %s9, 7
    %p48 = scmp.ne.s32.totalorder %s43, %s45
    %p49 = scmp.eq.s32.totalorder %s9, 0
    %p50 = por %p48, %p49
    %p51 = scmp.ne.s32.totalorder %s43, %s45
    %p52 = scmp.eq.s32.totalorder %s14, 7
    %p53 = por %p51, %p52
    %p54 = scmp.ne.s32.totalorder %s45, %s46
    %p55 = scmp.eq.s32.totalorder %s14, 0
    %p56 = por %p54, %p55
    %p57 = scmp.ne.s32.totalorder %s45, %s46
    %p58 = scmp.eq.s32.totalorder %s15, 7
    %p59 = por %p57, %p58
    %p61 = scmp.ne.s32.totalorder %s46, %s60
    %p62 = scmp.eq.s32.totalorder %s15, 0
    %p63 = por %p61, %p62
    %s65 = sadd.s32 %s64, 1
    %p68 = scmp.eq.s32.totalorder %s9, 7
    %p69 = scmp.ne.s32.totalorder %s64, %s66
    %p70 = scmp.eq.s32.totalorder %s9, 0
    %p71 = por %p69, %p70
    %p72 = scmp.ne.s32.totalorder %s64, %s66
    %p73 = scmp.eq.s32.totalorder %s14, 7
    %p74 = por %p72, %p73
    %p75 = scmp.ne.s32.totalorder %s66, %s67
    %p76 = scmp.eq.s32.totalorder %s14, 0
    %p77 = por %p75, %p76
    %p78 = scmp.ne.s32.totalorder %s66, %s67
    %p79 = scmp.eq.s32.totalorder %s15, 7
    %p80 = por %p78, %p79
    %p82 = scmp.ne.s32.totalorder %s67, %s81
    %p83 = scmp.eq.s32.totalorder %s15, 0
    %p84 = por %p82, %p83
    %s85 = ssub.s32 %s9, %s16
    %p86 = scmp.eq.s32.totalorder %s85, 0
    %s88 = sadd.s32 %s87, 1
    %s89 = scalar_select %p86, %s87, %s88
    %p92 = pneg %p86
    %p93 = scmp.eq.s32.totalorder %s9, 7
    %p94 = por %p92, %p93
    %p95 = scmp.ne.s32.totalorder %s87, %s90
    %p96 = scmp.eq.s32.totalorder %s9, 0
    %p97 = por %p95, %p96
    %p98 = scmp.ne.s32.totalorder %s87, %s90
    %p99 = scmp.eq.s32.totalorder %s14, 7
    %p100 = por %p98, %p99
    %p101 = scmp.ne.s32.totalorder %s90, %s91
    %p102 = scmp.eq.s32.totalorder %s14, 0
    %p103 = por %p101, %p102
    %p104 = scmp.ne.s32.totalorder %s90, %s91
    %p105 = scmp.eq.s32.totalorder %s15, 7
    %p106 = por %p104, %p105
    %p108 = scmp.ne.s32.totalorder %s91, %s107
    %p109 = scmp.eq.s32.totalorder %s15, 0
    %p110 = por %p108, %p109
    %p111 = scmp.le.s32.totalorder 1, %s9
    %p112 = scmp.lt.s32.totalorder %s9, 9
    %p113 = pnand %p111, %p112
    %p114 = pneg %p113
    // Predicated region
    $region9: #{tpu_custom_call.1} parent=5 // pred_check
      _
    $region10: #{tpu_custom_call.1} parent=5 // pred_check_branch
      %116 = sbr.rel (%p113) target = $region12
    $region11: #{tpu_custom_call.1} parent=5 // pred_region
      %s117 = ssub.s32 %s9, 1
      // Predicated region
      $region13: #{tpu_custom_call.1} parent=11 // pred_check
        %p118 = pneg %p56
      $region14: #{tpu_custom_call.1} parent=11 // pred_check_branch
        %120 = sbr.rel (%p118) target = $region16
      $region15: #{tpu_custom_call.1} parent=11 // pred_region
        _
      $region16: #{tpu_custom_call.1} parent=11 // pred_fallthru
        _
      // Predicated region
      $region17: #{tpu_custom_call.1} parent=11 // pred_check
        %p121 = pneg %p77
      $region18: #{tpu_custom_call.1} parent=11 // pred_check_branch
        %123 = sbr.rel (%p121) target = $region20
      $region19: #{tpu_custom_call.1} parent=11 // pred_region
        _
      $region20: #{tpu_custom_call.1} parent=11 // pred_fallthru
        _
    $region12: #{tpu_custom_call.1} parent=5 // pred_fallthru
      _
    %p124 = scmp.lt.s32.totalorder %s9, 8
    // Predicated region
    $region21: #{tpu_custom_call.1} parent=5 // pred_check
      %p125 = pneg %p124
    $region22: #{tpu_custom_call.1} parent=5 // pred_check_branch
      %127 = sbr.rel (%p125) target = $region24
    $region23: #{tpu_custom_call.1} parent=5 // pred_region
      // Predicated region
      $region25: #{tpu_custom_call.1} parent=23 // pred_check
        %p128 = pneg %p29
      $region26: #{tpu_custom_call.1} parent=23 // pred_check_branch
        %130 = sbr.rel (%p128) target = $region28
      $region27: #{tpu_custom_call.1} parent=23 // pred_region
        %s131 = smul.u32 2, %s9
        %p132 = scmp.lt.s32.totalorder %s131, 15
        %s133 = scalar_select %p132, %s131, 15
        %s134 = smul.addr %s133, 8
        %s135 = scalar_lea.vmem %s0, %s134
        %s136 = smul.u32 2, %s9
      $region28: #{tpu_custom_call.1} parent=23 // pred_fallthru
        _
    $region24: #{tpu_custom_call.1} parent=5 // pred_fallthru
      _
    %p137 = scmp.le.s32.totalorder 1, %s9
    %p138 = scmp.lt.s32.totalorder %s9, 9
    %p139 = pnand %p137, %p138
    %p140 = pneg %p139
    // Predicated region
    $region29: #{tpu_custom_call.1} parent=5 // pred_check
      _
    $region30: #{tpu_custom_call.1} parent=5 // pred_check_branch
      %142 = sbr.rel (%p139) target = $region32
    $region31: #{tpu_custom_call.1} parent=5 // pred_region
      %s143 = ssub.s32 %s9, 1
      %s144 = smul.u32 2, %s14
      %p145 = scmp.lt.s32.totalorder %s144, 15
      %s146 = scalar_select %p145, %s144, 15
      %s147 = smul.addr %s146, 8
      %s148 = scalar_lea.vmem %s0, %s147
      %p149 = pneg %p35
      %p150 = pneg %p32
      %p151 = pneg %p56
      %p152 = pneg %p53
      %p153 = pneg %p77
      %p154 = pneg %p74
      %p155 = pneg %p103
      %p156 = pneg %p100
      %p157 = scmp.lt.s32.totalorder %s14, 7
      %s158 = scalar_select %p157, %s14, 7
      %s159 = smul.addr %s158, 8
      %s160 = scalar_lea.vmem %s3, %s159
      %s161 = smul.u32 2, %s14
      %p162 = scmp.lt.s32.totalorder %s161, 15
      %s163 = scalar_select %p162, %s161, 15
      %s164 = smul.addr %s163, 8
      %s165 = scalar_lea.vmem %s0, %s164
      %s166 = smul.u32 2, %s14
      %p167 = scmp.lt.s32.totalorder %s14, 7
      %s168 = scalar_select %p167, %s14, 7
      %s169 = smul.addr %s168, 8
      %s170 = scalar_lea.vmem %s3, %s169
      %v172 = vld [vmem:[%s165] sm:$0xff]
      %v173 = vld [vmem:[%s165 + $0x8] sm:$0xff]
      %v174 = vpack.c.bf16 %v173, %v172
      %v175 = vld [vmem:[%s1] sm:$0xf]
      %v176 = vld [vmem:[%s1 + $0x4] sm:$0xf]
      %v179 = vunpack.c.l.b16 %v175
      %v180 = vunpack.c.l.b16 %v176
      %v181 = vpack.c.b16 %v180, %v179
      %vm183 = vcmask 130048
      %v185 = vsel %vm183, %v174, 0
      %187 = vmatprep.subr.bf16.mxu0 0
      %188 = vmatpush1.bf16.msra.mxu0 %v181
      %189 = vmatprep.subr.bf16.mxu0 0
      %190 = vmatpush1.bf16.msra.mxu0 0
      %191 = vmatprep.subr.bf16.mxu0 0
      %192 = vmatpush1.bf16.msra.mxu0 0
      %193 = vmatprep.subr.bf16.mxu0 0
      %194 = vmatpush1.bf16.msra.mxu0 0
      %195 = vmatprep.subr.bf16.mxu0 0
      %196 = vmatpush1.bf16.msra.mxu0 0
      %197 = vmatprep.subr.bf16.mxu0 0
      %198 = vmatpush1.bf16.msra.mxu0 0
      %199 = vmatprep.subr.bf16.mxu0 0
      %200 = vmatpush1.bf16.msra.mxu0 0
      %201 = vmatprep.subr.bf16.mxu0 0
      %202 = vmatpush1.bf16.msra.mxu0 0
      %203 = vmatprep.subr.bf16.mxu0 0
      %204 = vmatpush1.bf16.msra.mxu0 0
      %205 = vmatprep.subr.bf16.mxu0 0
      %206 = vmatpush1.bf16.msra.mxu0 0
      %207 = vmatprep.subr.bf16.mxu0 0
      %208 = vmatpush1.bf16.msra.mxu0 0
      %209 = vmatprep.subr.bf16.mxu0 0
      %210 = vmatpush1.bf16.msra.mxu0 0
      %211 = vmatprep.subr.bf16.mxu0 0
      %212 = vmatpush1.bf16.msra.mxu0 0
      %213 = vmatprep.subr.bf16.mxu0 0
      %214 = vmatpush1.bf16.msra.mxu0 0
      %215 = vmatprep.subr.bf16.mxu0 0
      %216 = vmatpush1.bf16.msra.mxu0 0
      %217 = vmatprep.subr.bf16.mxu0 0
      %218 = vmatpush1.bf16.msra.mxu0 0
      %219 = vmatprep.mubr.bf16.mxu0 0
      %220 = vmatmul.mubr.bf16.gmra.mrb[0].mxu0 %v185
      %v221 = vpop.f32.mrb[0].mxu0
      %v222 = vadd.f32 0.0, %v221
      %v223 = vpop.f32.mrb[0].mxu0
      %v224 = vpop.f32.mrb[0].mxu0
      %v225 = vadd.f32 0.0, %v224
      %v226 = vpop.f32.mrb[0].mxu0
      %227 = vdwg.mxu0
      %228 = vxpose.xlu0.b32.start [1/16] %v222, 128
      %229 = vxpose.xlu0.b32.cont [2/16] %v225, 128
      %230 = vxpose.xlu0.b32.cont [3/16] 0.0, 128
      %231 = vxpose.xlu0.b32.cont [4/16] 0.0, 128
      %232 = vxpose.xlu0.b32.cont [5/16] 0.0, 128
      %233 = vxpose.xlu0.b32.cont [6/16] 0.0, 128
      %234 = vxpose.xlu0.b32.cont [7/16] 0.0, 128
      %235 = vxpose.xlu0.b32.cont [8/16] 0.0, 128
      %236 = vxpose.xlu0.b32.cont [9/16] 0.0, 128
      %237 = vxpose.xlu0.b32.cont [10/16] 0.0, 128
      %238 = vxpose.xlu0.b32.cont [11/16] 0.0, 128
      %239 = vxpose.xlu0.b32.cont [12/16] 0.0, 128
      %240 = vxpose.xlu0.b32.cont [13/16] 0.0, 128
      %241 = vxpose.xlu0.b32.cont [14/16] 0.0, 128
      %242 = vxpose.xlu0.b32.cont [15/16] 0.0, 128
      %243 = vxpose.xlu0.b32.end [16/16] 0.0, 128
      %v244 = vpop.trf.xlu0
      %v245 = vpop.trf.xlu0
      %v246 = vpop.trf.xlu0
      %v247 = vpop.trf.xlu0
      %v248 = vpop.trf.xlu0
      %v249 = vpop.trf.xlu0
      %v250 = vpop.trf.xlu0
      %v251 = vpop.trf.xlu0
      %v252 = vpop.trf.xlu0
      %v253 = vpop.trf.xlu0
      %v254 = vpop.trf.xlu0
      %v255 = vpop.trf.xlu0
      %v256 = vpop.trf.xlu0
      %v257 = vpop.trf.xlu0
      %v258 = vpop.trf.xlu0
      %v259 = vpop.trf.xlu0
      %v260 = vld [vmem:[%s2] sm:$0xff]
      %v261 = vld [vmem:[%s2 + $0x8] sm:$0xff]
      %v263 = vsel %vm183, %v244, 0
      %265 = vmatprep.subr.mxu0 0.0
      %266 = vmatpush1.msra.mxu0 %v260
      %267 = vmatprep.subr.mxu0 0.0
      %268 = vmatpush1.msra.mxu0 %v261
      %269 = vmatprep.subr.mxu0 0.0
      %270 = vmatpush1.msra.mxu0 0.0
      %271 = vmatprep.subr.mxu0 0.0
      %272 = vmatpush1.msra.mxu0 0.0
      %273 = vmatprep.subr.mxu0 0.0
      %274 = vmatpush1.msra.mxu0 0.0
      %275 = vmatprep.subr.mxu0 0.0
      %276 = vmatpush1.msra.mxu0 0.0
      %277 = vmatprep.subr.mxu0 0.0
      %278 = vmatpush1.msra.mxu0 0.0
      %279 = vmatprep.subr.mxu0 0.0
      %280 = vmatpush1.msra.mxu0 0.0
      %281 = vmatprep.subr.mxu0 0.0
      %282 = vmatpush1.msra.mxu0 0.0
      %283 = vmatprep.subr.mxu0 0.0
      %284 = vmatpush1.msra.mxu0 0.0
      %285 = vmatprep.subr.mxu0 0.0
      %286 = vmatpush1.msra.mxu0 0.0
      %287 = vmatprep.subr.mxu0 0.0
      %288 = vmatpush1.msra.mxu0 0.0
      %289 = vmatprep.subr.mxu0 0.0
      %290 = vmatpush1.msra.mxu0 0.0
      %291 = vmatprep.subr.mxu0 0.0
      %292 = vmatpush1.msra.mxu0 0.0
      %293 = vmatprep.subr.mxu0 0.0
      %294 = vmatpush1.msra.mxu0 0.0
      %295 = vmatprep.subr.mxu0 0.0
      %296 = vmatpush1.msra.mxu0 0.0
      %297 = vmatprep.subr.mxu0 0.0
      %298 = vmatpush1.msra.mxu0 0.0
      %299 = vmatprep.subr.mxu0 0.0
      %300 = vmatpush1.msra.mxu0 0.0
      %301 = vmatprep.subr.mxu0 0.0
      %302 = vmatpush1.msra.mxu0 0.0
      %303 = vmatprep.subr.mxu0 0.0
      %304 = vmatpush1.msra.mxu0 0.0
      %305 = vmatprep.subr.mxu0 0.0
      %306 = vmatpush1.msra.mxu0 0.0
      %307 = vmatprep.subr.mxu0 0.0
      %308 = vmatpush1.msra.mxu0 0.0
      %309 = vmatprep.subr.mxu0 0.0
      %310 = vmatpush1.msra.mxu0 0.0
      %311 = vmatprep.subr.mxu0 0.0
      %312 = vmatpush1.msra.mxu0 0.0
      %313 = vmatprep.subr.mxu0 0.0
      %314 = vmatpush1.msra.mxu0 0.0
      %315 = vmatprep.subr.mxu0 0.0
      %316 = vmatpush1.msra.mxu0 0.0
      %317 = vmatprep.subr.mxu0 0.0
      %318 = vmatpush1.msra.mxu0 0.0
      %319 = vmatprep.subr.mxu0 0.0
      %320 = vmatpush1.msra.mxu0 0.0
      %321 = vmatprep.subr.mxu0 0.0
      %322 = vmatpush1.msra.mxu0 0.0
      %323 = vmatprep.subr.mxu0 0.0
      %324 = vmatpush1.msra.mxu0 0.0
      %325 = vmatprep.subr.mxu0 0.0
      %326 = vmatpush1.msra.mxu0 0.0
      %327 = vmatprep.subr.mxu0 0.0
      %328 = vmatpush1.msra.mxu0 0.0
      %329 = vmatprep.mubr.f32.mxu0 0.0
      %330 = vmatmul.mubr.f32.gmra.mrb[0].mxu0 %v263
      %v331 = vpop.f32.mrb[0].mxu0
      %v332 = vadd.f32 0.0, %v331
      %v333 = vpop.f32.mrb[0].mxu0
      %334 = vdwg.mxu0
      %335 = vxpose.xlu0.b32.start [1/16] %v332, 128
      %336 = vxpose.xlu0.b32.cont [2/16] 0.0, 128
      %337 = vxpose.xlu0.b32.cont [3/16] 0.0, 128
      %338 = vxpose.xlu0.b32.cont [4/16] 0.0, 128
      %339 = vxpose.xlu0.b32.cont [5/16] 0.0, 128
      %340 = vxpose.xlu0.b32.cont [6/16] 0.0, 128
      %341 = vxpose.xlu0.b32.cont [7/16] 0.0, 128
      %342 = vxpose.xlu0.b32.cont [8/16] 0.0, 128
      %343 = vxpose.xlu0.b32.cont [9/16] 0.0, 128
      %344 = vxpose.xlu0.b32.cont [10/16] 0.0, 128
      %345 = vxpose.xlu0.b32.cont [11/16] 0.0, 128
      %346 = vxpose.xlu0.b32.cont [12/16] 0.0, 128
      %347 = vxpose.xlu0.b32.cont [13/16] 0.0, 128
      %348 = vxpose.xlu0.b32.cont [14/16] 0.0, 128
      %349 = vxpose.xlu0.b32.cont [15/16] 0.0, 128
      %350 = vxpose.xlu0.b32.end [16/16] 0.0, 128
      %v351 = vpop.trf.xlu0
      %v352 = vpop.trf.xlu0
      %v353 = vpop.trf.xlu0
      %v354 = vpop.trf.xlu0
      %v355 = vpop.trf.xlu0
      %v356 = vpop.trf.xlu0
      %v357 = vpop.trf.xlu0
      %v358 = vpop.trf.xlu0
      %v359 = vpop.trf.xlu0
      %v360 = vpop.trf.xlu0
      %v361 = vpop.trf.xlu0
      %v362 = vpop.trf.xlu0
      %v363 = vpop.trf.xlu0
      %v364 = vpop.trf.xlu0
      %v365 = vpop.trf.xlu0
      %v366 = vpop.trf.xlu0
      %vm367 = vcmask 64512
      %368 = vst.msk [vmem:[%s170] sm:$0xff] %vm367, %v351
      %p369 = scmp.lt.s32.totalorder %s14, 7
      %s370 = scalar_select %p369, %s14, 7
      %s371 = smul.addr %s370, 8
      %s372 = scalar_lea.vmem %s3, %s371
      // Predicated region
      $region33: #{tpu_custom_call.1} parent=31 // pred_check
        %p373 = pneg %p100
      $region34: #{tpu_custom_call.1} parent=31 // pred_check_branch
        %375 = sbr.rel (%p373) target = $region36
      $region35: #{tpu_custom_call.1} parent=31 // pred_region
        _
      $region36: #{tpu_custom_call.1} parent=31 // pred_fallthru
        _
    $region32: #{tpu_custom_call.1} parent=5 // pred_fallthru
      _
    %p376 = scmp.le.s32.totalorder 2, %s9
    // Predicated region
    $region37: #{tpu_custom_call.1} parent=5 // pred_check
      %p377 = pneg %p376
    $region38: #{tpu_custom_call.1} parent=5 // pred_check_branch
      %379 = sbr.rel (%p377) target = $region40
    $region39: #{tpu_custom_call.1} parent=5 // pred_region
      %s380 = ssub.s32 %s9, 2
      // Predicated region
      $region41: #{tpu_custom_call.1} parent=39 // pred_check
        %p381 = pneg %p106
      $region42: #{tpu_custom_call.1} parent=39 // pred_check_branch
        %383 = sbr.rel (%p381) target = $region44
      $region43: #{tpu_custom_call.1} parent=39 // pred_region
        %p384 = scmp.lt.s32.totalorder %s15, 7
        %s385 = scalar_select %p384, %s15, 7
        %s386 = smul.addr %s385, 8
        %s387 = scalar_lea.vmem %s3, %s386
      $region44: #{tpu_custom_call.1} parent=39 // pred_fallthru
        _
    $region40: #{tpu_custom_call.1} parent=5 // pred_fallthru
      _
  $region6: #{tpu_custom_call.1} parent=0 // loop_footer
    %s13 = sadd.s32 1, %s9
  $region7: #{tpu_custom_call.1} parent=0 // loop_footer_branch
    %8 = sbr.rel target = $region3
  $region8: #{tpu_custom_call.1} parent=0 // loop_exit
    _

</llo_original>
